<compile_context>
chip_gen: v5e
topology: v5e:2x2
jax: 0.10.0
libtpu: 0.0.40
codegen_flags: <defaults>
</compile_context>

<pallas_src>
import functools

import jax
import jax.numpy as jnp
from jax.experimental import pallas as pl
from jax.experimental.pallas import tpu as pltpu


# ----------------------------------------------------------------------------
# VMEM budget / tile-size helpers
# ----------------------------------------------------------------------------
@functools.lru_cache(maxsize=1)
def _vmem_budget():
    """~60% of this generation's per-core VMEM (v7x: ~38 MiB, v5e/v6e: ~76 MiB)."""
    try:
        info = pltpu.get_tpu_info()
        cap = int(getattr(info, "vmem_capacity_bytes", 128 * 1024 * 1024))
    except Exception:
        cap = 64 * 1024 * 1024          # conservative: v7x per-TC VMEM
    return int(cap * 0.6)


def _round_up(x, m):
    return ((x + m - 1) // m) * m


def _pad_rows(x, m_pad):
    m = x.shape[0]
    if m_pad == m:
        return x
    return jnp.pad(x, ((0, m_pad - m), (0, 0)))


def _pick_col_tile(n, cap=1024):
    """Full N when small; else the largest 256/128-aligned divisor (MXU-friendly)."""
    if n <= cap:
        return n
    for t in (1024, 768, 512, 384, 256, 128):
        if n % t == 0:
            return t
    return n  # TODO(synk): pad N in the wrapper for widths with no nice divisor.


_TM_CANDIDATES = (1024, 512, 256, 128, 64, 32, 16, 8)


def _pick_row_tile(m, k, tn, budget, extra_row_blocks=0):
    """Largest row tile whose double-buffered bf16 blocks fit the VMEM budget."""
    m_cap = _round_up(m, 8)
    for tm in _TM_CANDIDATES:
        if tm > m_cap:
            continue
        per_step = (tm * k + k * tn + (1 + extra_row_blocks) * tm * tn) * 2  # bf16
        if 2 * per_step <= budget:                                           # 2x bufs
            return tm
    return 8


# ----------------------------------------------------------------------------
# Full-K linear: y = act(x @ w + b)        (bf16 in/out, f32 accumulate)
# ----------------------------------------------------------------------------
def _linear_kernel(x_ref, w_ref, b_ref, o_ref, *, activation):
    y = jnp.dot(x_ref[...], w_ref[...], preferred_element_type=jnp.float32)
    y = y + b_ref[...].astype(jnp.float32)
    if activation == "gelu":        # exact (erf) GELU, as in HF BERT/RoBERTa
        y = 0.5 * y * (1.0 + jax.lax.erf(y * 0.7071067811865476))
    elif activation == "tanh":
        y = jnp.tanh(y)
    o_ref[...] = y.astype(o_ref.dtype)


def linear(x, w, b, activation="none", out_dtype=jnp.bfloat16):
    """y = act(x @ w + b).  x:(M,K)  w:(K,N)  b:(N,) -> (M,N) in out_dtype."""
    M, K = x.shape
    N = w.shape[1]
    budget = _vmem_budget()
    tn = _pick_col_tile(N)
    tm = _pick_row_tile(M, K, tn, budget)
    m_pad = _round_up(M, tm)
    xp = _pad_rows(x.astype(jnp.bfloat16), m_pad)

    out = pl.pallas_call(
        functools.partial(_linear_kernel, activation=activation),
        out_shape=jax.ShapeDtypeStruct((m_pad, N), out_dtype),
        grid=(m_pad // tm, N // tn),
        in_specs=[
            pl.BlockSpec((tm, K), lambda i, j: (i, 0)),
            pl.BlockSpec((K, tn), lambda i, j: (0, j)),
            pl.BlockSpec((1, tn), lambda i, j: (0, j)),
        ],
        out_specs=pl.BlockSpec((tm, tn), lambda i, j: (i, j)),
        compiler_params=pltpu.CompilerParams(
            dimension_semantics=("parallel", "parallel"),
            vmem_limit_bytes=budget,
        ),
    )(xp, w.astype(jnp.bfloat16), b.astype(jnp.float32).reshape(1, N))
    return out[:M] if m_pad != M else out


# ----------------------------------------------------------------------------
# Fused linear + residual add + LayerNorm (full N row resident per tile)
# ----------------------------------------------------------------------------
def _linear_add_ln_kernel(x_ref, w_ref, b_ref, r_ref, g_ref, bb_ref, o_ref, *, eps):
    y = jnp.dot(x_ref[...], w_ref[...], preferred_element_type=jnp.float32)
    y = y + b_ref[...].astype(jnp.float32) + r_ref[...].astype(jnp.float32)
    mean = jnp.mean(y, axis=-1, keepdims=True)
    var = jnp.mean(jnp.square(y - mean), axis=-1, keepdims=True)
    y = (y - mean) * jax.lax.rsqrt(var + eps) * g_ref[...] + bb_ref[...]
    o_ref[...] = y.astype(o_ref.dtype)


def linear_add_layernorm(x, w, b, residual, gamma, beta, eps=1e-5,
                         out_dtype=jnp.bfloat16):
    """LayerNorm((x @ w + b) + residual).  x:(M,K) w:(K,N) residual:(M,N) -> (M,N)."""
    M, K = x.shape
    N = w.shape[1]
    budget = _vmem_budget()
    tm = _pick_row_tile(M, K, N, budget, extra_row_blocks=1)
    m_pad = _round_up(M, tm)
    xp = _pad_rows(x.astype(jnp.bfloat16), m_pad)
    rp = _pad_rows(residual.astype(jnp.bfloat16), m_pad)

    out = pl.pallas_call(
        functools.partial(_linear_add_ln_kernel, eps=eps),
        out_shape=jax.ShapeDtypeStruct((m_pad, N), out_dtype),
        grid=(m_pad // tm,),
        in_specs=[
            pl.BlockSpec((tm, K), lambda i: (i, 0)),
            pl.BlockSpec((K, N), lambda i: (0, 0)),
            pl.BlockSpec((1, N), lambda i: (0, 0)),
            pl.BlockSpec((tm, N), lambda i: (i, 0)),
            pl.BlockSpec((1, N), lambda i: (0, 0)),
            pl.BlockSpec((1, N), lambda i: (0, 0)),
        ],
        out_specs=pl.BlockSpec((tm, N), lambda i: (i, 0)),
        compiler_params=pltpu.CompilerParams(
            dimension_semantics=("parallel",),
            vmem_limit_bytes=budget,
        ),
    )(xp, w.astype(jnp.bfloat16), b.astype(jnp.float32).reshape(1, N), rp,
      gamma.astype(jnp.float32).reshape(1, N), beta.astype(jnp.float32).reshape(1, N))
    return out[:M] if m_pad != M else out


# ----------------------------------------------------------------------------
# Standalone LayerNorm (embeddings), row-tiled; f32 math, bf16 output
# ----------------------------------------------------------------------------
def _layernorm_kernel(x_ref, g_ref, b_ref, o_ref, *, eps):
    x = x_ref[...].astype(jnp.float32)
    mean = jnp.mean(x, axis=-1, keepdims=True)
    var = jnp.mean(jnp.square(x - mean), axis=-1, keepdims=True)
    o_ref[...] = ((x - mean) * jax.lax.rsqrt(var + eps) * g_ref[...]
                  + b_ref[...]).astype(o_ref.dtype)


def layernorm(x, gamma, beta, eps=1e-5, out_dtype=jnp.bfloat16):
    M, D = x.shape
    tm = min(_round_up(M, 8), 512)
    m_pad = _round_up(M, tm)
    xp = _pad_rows(x, m_pad)
    out = pl.pallas_call(
        functools.partial(_layernorm_kernel, eps=eps),
        out_shape=jax.ShapeDtypeStruct((m_pad, D), out_dtype),
        grid=(m_pad // tm,),
        in_specs=[
            pl.BlockSpec((tm, D), lambda i: (i, 0)),
            pl.BlockSpec((1, D), lambda i: (0, 0)),
            pl.BlockSpec((1, D), lambda i: (0, 0)),
        ],
        out_specs=pl.BlockSpec((tm, D), lambda i: (i, 0)),
        compiler_params=pltpu.CompilerParams(
            dimension_semantics=("parallel",),
            vmem_limit_bytes=_vmem_budget(),
        ),
    )(xp, gamma.astype(jnp.float32).reshape(1, D), beta.astype(jnp.float32).reshape(1, D))
    return out[:M] if m_pad != M else out


# ----------------------------------------------------------------------------
# Multi-head attention: grid = (batch, head-pair, q-tile); head-pair Q/K/V slabs
# sliced straight out of the fused (B*S, 3D) QKV activation via index_maps.
# Softmax scale is pre-folded into W_q / b_q.  Output store is one dense slab.
# ----------------------------------------------------------------------------
def _attention_kernel(q_ref, k_ref, v_ref, bias_ref, o_ref, *, Dh):
    tq = q_ref.shape[0]
    S = k_ref.shape[0]
    n_sub = q_ref.shape[-1] // Dh          # heads in this slab (1 or 2)
    # hoisted once per grid step (JAX does not CSE broadcasts)
    bias = jnp.broadcast_to(bias_ref[...].astype(jnp.float32), (tq, S))
    outs = []
    for h in range(n_sub):
        sl = slice(h * Dh, (h + 1) * Dh)
        q = q_ref[:, sl]                   # (tq, Dh) bf16
        k = k_ref[:, sl]                   # (S, Dh)  bf16
        v = v_ref[:, sl]                   # (S, Dh)  bf16
        # contract on Dh for both operands -> (tq, S); no explicit K transpose
        s = jax.lax.dot_general(q, k, (((1,), (1,)), ((), ())),
                                preferred_element_type=jnp.float32)
        s = s + bias                       # 1/sqrt(Dh) already folded into W_q
        m = jnp.max(s, axis=-1, keepdims=True)
        p = jnp.exp(s - m)
        l = jnp.sum(p, axis=-1, keepdims=True)
        p = p * pl.reciprocal(l, approx=True)
        ctx = jnp.dot(p.astype(v.dtype), v, preferred_element_type=jnp.float32)
        outs.append(ctx.astype(o_ref.dtype))
    o_ref[...] = outs[0] if n_sub == 1 else jnp.concatenate(outs, axis=-1)


def attention(qkv, mask_bias, *, B, S, H, Dh):
    """qkv:(B*S, 3D) bf16, column layout [Q | K | V]; mask_bias:(B, S) -> (B*S, D) bf16."""
    D = H * Dh
    HP = 2 if H % 2 == 0 else 1            # heads per slab (pairs -> 128-lane slabs)
    G = H // HP
    block_w = HP * Dh
    tq = S if S <= 128 else (128 if S % 128 == 0 else S)
    nq = S // tq

    def q_map(b, g, qi): return (b * nq + qi, g)
    def k_map(b, g, qi): return (b, G + g)
    def v_map(b, g, qi): return (b, 2 * G + g)
    def m_map(b, g, qi): return (b, 0)
    def o_map(b, g, qi): return (b * nq + qi, g)

    return pl.pallas_call(
        functools.partial(_attention_kernel, Dh=Dh),
        out_shape=jax.ShapeDtypeStruct((B * S, D), jnp.bfloat16),
        grid=(B, G, nq),
        in_specs=[
            pl.BlockSpec((tq, block_w), q_map),    # Q head-pair slab
            pl.BlockSpec((S, block_w), k_map),     # K head-pair slab (resident over qi)
            pl.BlockSpec((S, block_w), v_map),     # V head-pair slab (resident over qi)
            pl.BlockSpec((1, S), m_map),           # additive mask bias row b
        ],
        out_specs=pl.BlockSpec((tq, block_w), o_map),
        compiler_params=pltpu.CompilerParams(
            dimension_semantics=("parallel", "parallel", "parallel"),
            vmem_limit_bytes=_vmem_budget(),
        ),
    )(qkv, qkv, qkv, mask_bias)


# ----------------------------------------------------------------------------
# Fused pooler (tanh linear) + dropout(identity, eval) + fc logits
# ----------------------------------------------------------------------------
def _pool_fc_kernel(cls_ref, wp_ref, bp_ref, wf_ref, bf_ref, o_ref):
    pooled = jnp.tanh(
        jnp.dot(cls_ref[...], wp_ref[...], preferred_element_type=jnp.float32)
        + bp_ref[...])
    # TODO(synk): nn.Dropout(p=0.3) is identity here (eval/inference mode).
    logits = (jnp.dot(pooled.astype(jnp.bfloat16), wf_ref[...],
                      preferred_element_type=jnp.float32)
              + bf_ref[...])
    o_ref[...] = logits.astype(o_ref.dtype)


def pool_and_fc(cls, wp, bp, wf, bf):
    """cls:(B,D) -> logits:(B, n_classes) = tanh(cls@wp+bp) @ wf + bf (f32)."""
    B, D = cls.shape
    N = wf.shape[1]
    return pl.pallas_call(
        _pool_fc_kernel,
        out_shape=jax.ShapeDtypeStruct((B, N), jnp.float32),
        grid=(1,),
        in_specs=[
            pl.BlockSpec((B, D), lambda i: (0, 0)),
            pl.BlockSpec((D, D), lambda i: (0, 0)),
            pl.BlockSpec((1, D), lambda i: (0, 0)),
            pl.BlockSpec((D, N), lambda i: (0, 0)),
            pl.BlockSpec((1, N), lambda i: (0, 0)),
        ],
        out_specs=pl.BlockSpec((B, N), lambda i: (0, 0)),
        compiler_params=pltpu.CompilerParams(vmem_limit_bytes=_vmem_budget()),
    )(cls.astype(jnp.bfloat16), wp.astype(jnp.bfloat16),
      bp.astype(jnp.float32).reshape(1, D), wf.astype(jnp.bfloat16),
      bf.astype(jnp.float32).reshape(1, N))


# ----------------------------------------------------------------------------
# Model glue (plain JAX); hidden state kept as bf16 (B*S, D) through the encoder
# ----------------------------------------------------------------------------
def encoder_layer(x2d, p, mask_bias, B, S, H, Dh):
    qkv = linear(x2d, p["w_qkv"], p["b_qkv"])                  # (B*S, 3D) bf16, fused QKV
    ctx = attention(qkv, mask_bias, B=B, S=S, H=H, Dh=Dh)      # (B*S, D) bf16
    # attention-output projection with residual+LN fused into the epilogue
    x2d = linear_add_layernorm(ctx, p["wo"], p["bo"], x2d, p["ln1_g"], p["ln1_b"])
    h = linear(x2d, p["w1"], p["b1"], activation="gelu")       # (B*S, 4D) bf16
    # FFN-down projection with residual+LN fused into the epilogue
    x2d = linear_add_layernorm(h, p["w2"], p["b2"], x2d, p["ln2_g"], p["ln2_b"])
    return x2d


def sentiment_classifier_forward(params, input_ids, attention_mask):
    """Mirrors SentimentClassifier.forward (eval mode)."""
    B, S = input_ids.shape
    H = params["config"]["heads"]
    D = params["config"]["hidden"]
    Dh = D // H

    # --- embeddings ---------------------------------------------------------
    # TODO(synk): RoBERTa/phobert offsets position ids by padding_idx+1; with
    #             synthetic weights plain 0..S-1 positions are used.
    positions = jnp.arange(S, dtype=jnp.int32)
    x = (jnp.take(params["word_emb"], input_ids, axis=0)
         + jnp.take(params["pos_emb"], positions, axis=0)[None, :, :]
         + params["type_emb"][0][None, None, :])
    x2d = layernorm(x.reshape(B * S, D), params["emb_ln_g"], params["emb_ln_b"])

    # additive attention-mask bias: 0 for real tokens, -10000 for padding
    mask_bias = (1.0 - attention_mask.astype(jnp.float32)) * -10000.0    # (B, S)

    # --- transformer encoder ------------------------------------------------
    for layer_params in params["layers"]:
        x2d = encoder_layer(x2d, layer_params, mask_bias, B, S, H, Dh)

    # --- pooler: tanh(W_p @ hidden[:, 0] + b_p), dropout(eval)=id, fc --------
    cls = x2d.reshape(B, S, D)[:, 0, :]                                  # (B, D) bf16
    logits = pool_and_fc(cls, params["pool_w"], params["pool_b"],
                         params["fc_w"], params["fc_b"])
    return logits


# ----------------------------------------------------------------------------
# Deterministic synthetic parameter init (matmul weights pre-cast to bf16)
# ----------------------------------------------------------------------------
def init_params(key, *, vocab, max_pos, n_layers, hidden, heads, inter, n_classes):
    keys = iter(jax.random.split(key, 8 + n_layers * 8))

    def nrm(shape, std=0.02):
        return std * jax.random.normal(next(keys), shape, dtype=jnp.float32)

    Dh = hidden // heads
    scale = 1.0 / (Dh ** 0.5)

    params = {
        "config": {"hidden": hidden, "heads": heads},
        "word_emb": nrm((vocab, hidden)),
        "pos_emb": nrm((max_pos, hidden)),
        "type_emb": nrm((1, hidden)),
        "emb_ln_g": jnp.ones((hidden,), jnp.float32),
        "emb_ln_b": jnp.zeros((hidden,), jnp.float32),
        "layers": [],
    }
    for _ in range(n_layers):
        # fused QKV projection weight (D, 3D), column layout [Q | K | V];
        # fold 1/sqrt(Dh) softmax scale into the Q columns (and Q bias).
        w_qkv = nrm((hidden, 3 * hidden))
        b_qkv = jnp.zeros((3 * hidden,), jnp.float32)
        w_qkv = w_qkv.at[:, :hidden].multiply(scale)
        b_qkv = b_qkv.at[:hidden].multiply(scale)
        params["layers"].append({
            "w_qkv": w_qkv.astype(jnp.bfloat16),
            "b_qkv": b_qkv,
            "wo": nrm((hidden, hidden)).astype(jnp.bfloat16),
            "bo": jnp.zeros((hidden,), jnp.float32),
            "ln1_g": jnp.ones((hidden,), jnp.float32),
            "ln1_b": jnp.zeros((hidden,), jnp.float32),
            "w1": nrm((hidden, inter)).astype(jnp.bfloat16),
            "b1": jnp.zeros((inter,), jnp.float32),
            "w2": nrm((inter, hidden)).astype(jnp.bfloat16),
            "b2": jnp.zeros((hidden,), jnp.float32),
            "ln2_g": jnp.ones((hidden,), jnp.float32),
            "ln2_b": jnp.zeros((hidden,), jnp.float32),
        })
    params["pool_w"] = nrm((hidden, hidden)).astype(jnp.bfloat16)
    params["pool_b"] = jnp.zeros((hidden,), jnp.float32)
    # fc: nn.init.normal_(weight, std=0.02); nn.init.normal_(bias, 0) -> N(0, 1)
    params["fc_w"] = nrm((hidden, n_classes), std=0.02).astype(jnp.bfloat16)
    params["fc_b"] = 1.0 * jax.random.normal(next(keys), (n_classes,), dtype=jnp.float32)
    return params


# ----------------------------------------------------------------------------
if __name__ == "__main__":
    B, S = 2, 8
    HIDDEN, HEADS, INTER, LAYERS = 64, 2, 128, 2      # Dh = 32 (head-pair slab = 64 lanes)
    VOCAB, MAX_POS, N_CLASSES = 100, 16, 3

    root = jax.random.PRNGKey(0)
    k_params, k_ids = jax.random.split(root)

    params = init_params(k_params, vocab=VOCAB, max_pos=MAX_POS,
                         n_layers=LAYERS, hidden=HIDDEN, heads=HEADS,
                         inter=INTER, n_classes=N_CLASSES)

    input_ids = jax.random.randint(k_ids, (B, S), 0, VOCAB, dtype=jnp.int32)
    attention_mask = jnp.array([[1, 1, 1, 1, 1, 1, 1, 1],
                                [1, 1, 1, 1, 1, 1, 0, 0]], dtype=jnp.float32)

    logits = sentiment_classifier_forward(params, input_ids, attention_mask)
    jax.block_until_ready(logits)
    assert logits.shape == (B, N_CLASSES) and logits.dtype == jnp.float32
    print("KERNEL_OK")
</pallas_src>

<mosaic_0001>
module attributes {stable_mosaic.version = 11 : i64} {
  func.func @_layernorm_kernel(%arg0: i32, %arg1: memref<16x64xf32, #tpu.memory_space<vmem>>, %arg2: memref<1x64xf32, #tpu.memory_space<vmem>>, %arg3: memref<1x64xf32, #tpu.memory_space<vmem>>, %arg4: memref<16x64xbf16, #tpu.memory_space<vmem>>) attributes {dimension_semantics = [#tpu.dimension_semantics<parallel>], iteration_bounds = array<i64: 1>, scalar_prefetch = 0 : i64, scratch_operands = 0 : i64, tpu.core_type = #tpu.core_type<tc>, window_params = [{transform_indices = @transform_0, window_bounds = array<i64: 16, 64>}, {pipeline_mode = #tpu.pipeline_mode<synchronous>, transform_indices = @transform_1, window_bounds = array<i64: 1, 64>}, {pipeline_mode = #tpu.pipeline_mode<synchronous>, transform_indices = @transform_2, window_bounds = array<i64: 1, 64>}, {transform_indices = @transform_3, window_bounds = array<i64: 16, 64>}]} {
    %c0 = arith.constant 0 : index
    %c0_0 = arith.constant 0 : index
    %0 = vector.load %arg1[%c0, %c0_0] : memref<16x64xf32, #tpu.memory_space<vmem>>, vector<16x64xf32>
    %cst = arith.constant dense<0.000000e+00> : vector<16xf32>
    %1 = vector.multi_reduction <add>, %0, %cst [1] : vector<16x64xf32> to vector<16xf32>
    %2 = vector.shape_cast %1 : vector<16xf32> to vector<16x1xf32>
    %cst_1 = arith.constant 6.400000e+01 : f32
    %3 = vector.broadcast %cst_1 : f32 to vector<16x1xf32>
    %4 = arith.divf %2, %3 : vector<16x1xf32>
    %5 = vector.broadcast %4 : vector<16x1xf32> to vector<16x64xf32>
    %6 = arith.subf %0, %5 : vector<16x64xf32>
    %7 = arith.mulf %6, %6 : vector<16x64xf32>
    %cst_2 = arith.constant dense<0.000000e+00> : vector<16xf32>
    %8 = vector.multi_reduction <add>, %7, %cst_2 [1] : vector<16x64xf32> to vector<16xf32>
    %9 = vector.shape_cast %8 : vector<16xf32> to vector<16x1xf32>
    %cst_3 = arith.constant 6.400000e+01 : f32
    %10 = vector.broadcast %cst_3 : f32 to vector<16x1xf32>
    %11 = arith.divf %9, %10 : vector<16x1xf32>
    %12 = vector.broadcast %4 : vector<16x1xf32> to vector<16x64xf32>
    %13 = arith.subf %0, %12 : vector<16x64xf32>
    %cst_4 = arith.constant 9.99999974E-6 : f32
    %14 = vector.broadcast %cst_4 : f32 to vector<16x1xf32>
    %15 = arith.addf %11, %14 : vector<16x1xf32>
    %16 = math.rsqrt %15 : vector<16x1xf32>
    %17 = vector.broadcast %16 : vector<16x1xf32> to vector<16x64xf32>
    %18 = arith.mulf %13, %17 : vector<16x64xf32>
    %c0_5 = arith.constant 0 : index
    %c0_6 = arith.constant 0 : index
    %19 = vector.load %arg2[%c0_5, %c0_6] : memref<1x64xf32, #tpu.memory_space<vmem>>, vector<1x64xf32>
    %20 = vector.broadcast %19 : vector<1x64xf32> to vector<16x64xf32>
    %21 = arith.mulf %18, %20 : vector<16x64xf32>
    %c0_7 = arith.constant 0 : index
    %c0_8 = arith.constant 0 : index
    %22 = vector.load %arg3[%c0_7, %c0_8] : memref<1x64xf32, #tpu.memory_space<vmem>>, vector<1x64xf32>
    %23 = vector.broadcast %22 : vector<1x64xf32> to vector<16x64xf32>
    %24 = arith.addf %21, %23 : vector<16x64xf32>
    %25 = arith.truncf %24 : vector<16x64xf32> to vector<16x64xbf16>
    %c0_9 = arith.constant 0 : index
    %c0_10 = arith.constant 0 : index
    %26 = vector.load %arg4[%c0_9, %c0_10] : memref<16x64xbf16, #tpu.memory_space<vmem>>, vector<16x64xbf16>
    tpu.vector_store %arg4[%c0_9, %c0_10], %25 {strides = array<i32>} : memref<16x64xbf16, #tpu.memory_space<vmem>>, vector<16x64xbf16>,
    return
  }
  func.func @transform_0(%arg0: i32) -> (i32, i32) {
    %c0_i32 = arith.constant 0 : i32
    %c0_i32_0 = arith.constant 0 : i32
    return %arg0, %c0_i32 : i32, i32
  }
  func.func @transform_1(%arg0: i32) -> (i32, i32) {
    %c0_i32 = arith.constant 0 : i32
    %c0_i32_0 = arith.constant 0 : i32
    %c0_i32_1 = arith.constant 0 : i32
    return %c0_i32, %c0_i32_0 : i32, i32
  }
  func.func @transform_2(%arg0: i32) -> (i32, i32) {
    %c0_i32 = arith.constant 0 : i32
    %c0_i32_0 = arith.constant 0 : i32
    %c0_i32_1 = arith.constant 0 : i32
    return %c0_i32, %c0_i32_0 : i32, i32
  }
  func.func @transform_3(%arg0: i32) -> (i32, i32) {
    %c0_i32 = arith.constant 0 : i32
    %c0_i32_0 = arith.constant 0 : i32
    return %arg0, %c0_i32 : i32, i32
  }
}

</mosaic_0001>

<llo_original>
// kernel: tpu_custom_call.1
$region0: #{tpu_custom_call.1}
  #allocation0 [shape = 'u32[]', space=smem, size = 0x4, offset = 0x4, fixed_abs, tag = 'smem constant byte address 0x4 - core index']
  #allocation1 [shape = 'u32[72,128]{1,0:T(1,128)}', space=vmem, size = 0x9000, scoped, tag = 'internal scratch']
  %s0 = inlined_call_operand.hbm [shape: f32[16,64], index: 0, kind: input, shape index: {}]
  %s1 = inlined_call_operand.hbm [shape: f32[1,64], index: 1, kind: input, shape index: {}]
  %s2 = inlined_call_operand.vmem [shape: f32[1,64], index: 2, kind: input, shape index: {}]
  %s3 = inlined_call_operand.hbm [shape: bf16[16,64], index: 3, kind: output, shape index: {}]
  %s4 = sld [smem:[#allocation0]]
  $region30: #{tpu_custom_call.1} parent=0
    _
  %s6 = ssub.s32 1, %s4
  %s7 = scalar_select 0, %s6, %s4
  $region1: #{tpu_custom_call.1} parent=0
    #allocation2 [shape = 'u8[8192]{0}', space=vmem, size = 0x2000, scoped, tag = 'input window, operand 0, single buffered']
    #allocation3 [shape = 's32[1]{0}', space=sflag, size = 0x4, scoped, tag = 'scoped memory for tpu_custom_call.1']
    #allocation4 [shape = 's32[1]{0}', space=sflag, size = 0x4, scoped, tag = 'scoped memory for tpu_custom_call.1']
    #allocation5 [shape = 'u8[512]{0}', space=vmem, size = 0x400, scoped, tag = 'input window, operand 1, single buffered']
    #allocation6 [shape = 's32[1]{0}', space=sflag, size = 0x4, scoped, tag = 'scoped memory for tpu_custom_call.1']
    #allocation7 [shape = 'u8[4096]{0}', space=vmem, size = 0x1000, scoped, tag = 'output window, operand 0, single buffered']
    %8 = vsyncpa [#allocation3], 0
    %9 = vsyncpa [#allocation6], 0
    %10 = vsyncpa [#allocation4], 0
    // Predicated region
    $region2: #{tpu_custom_call.1} parent=1 // pred_check
      _
    $region3: #{tpu_custom_call.1} parent=1 // pred_check_branch
      %12 = sbr.rel (0) target = $region5
    $region4: #{tpu_custom_call.1} parent=1 // pred_region
      %14 = vsyncadd [#allocation3], 0
      %s15 = sshll.u32 %s0, 4
      %s16 = int_to_ptr.hbm [resolvable:$true] %s15
      %s17 = sshll.u32 [#allocation2], 4
      %s18 = int_to_ptr.vmem [resolvable:$true] %s17
      %23 = dma.hbm_to_vmem [thread:$0]  %s16, 256, %s18, [#allocation3], 128, 128, 8
    $region5: #{tpu_custom_call.1} parent=1 // pred_fallthru
      _
    // Predicated region
    $region6: #{tpu_custom_call.1} parent=1 // pred_check
      _
    $region7: #{tpu_custom_call.1} parent=1 // pred_check_branch
      %25 = sbr.rel (0) target = $region9
    $region8: #{tpu_custom_call.1} parent=1 // pred_region
      %27 = vsyncadd [#allocation6], 0
      %s29 = sshll.u32 %s1, 4
      %s30 = int_to_ptr.hbm [resolvable:$true] %s29
      %s31 = sshll.u32 [#allocation5], 4
      %s32 = int_to_ptr.vmem [resolvable:$true] %s31
      %34 = dma.hbm_to_vmem [thread:$0]  %s30, 16, %s32, [#allocation6]
    $region9: #{tpu_custom_call.1} parent=1 // pred_fallthru
      _
    // Predicated region
    $region10: #{tpu_custom_call.1} parent=1 // pred_check
      _
    $region11: #{tpu_custom_call.1} parent=1 // pred_check_branch
      %36 = sbr.rel (0) target = $region13
    $region12: #{tpu_custom_call.1} parent=1 // pred_region
      _
    $region13: #{tpu_custom_call.1} parent=1 // pred_fallthru
      _
    // Predicated region
    $region14: #{tpu_custom_call.1} parent=1 // pred_check
      _
    $region15: #{tpu_custom_call.1} parent=1 // pred_check_branch
      %38 = sbr.rel (0) target = $region17
    $region16: #{tpu_custom_call.1} parent=1 // pred_region
      %40 = dma.done [#allocation3], 256
    $region17: #{tpu_custom_call.1} parent=1 // pred_fallthru
      _
    // Predicated region
    $region18: #{tpu_custom_call.1} parent=1 // pred_check
      _
    $region19: #{tpu_custom_call.1} parent=1 // pred_check_branch
      %42 = sbr.rel (0) target = $region21
    $region20: #{tpu_custom_call.1} parent=1 // pred_region
      %44 = dma.done [#allocation6], 16
    $region21: #{tpu_custom_call.1} parent=1 // pred_fallthru
      _
    %v45 = vld [vmem:[#allocation2] sm:$0xff]
    %v46 = vld [vmem:[#allocation2 + $0x8] sm:$0xff]
    %vm47 = vcmask 523264
    %v48 = vsel %vm47, %v45, 0.0
    %49 = vadd.xlane.f32.xlu0 %v48
    %v50 = vpop.xlane.xlu0 %49
    %v51 = vsel %vm47, %v46, 0.0
    %52 = vadd.xlane.f32.xlu0 %v51
    %v53 = vpop.xlane.xlu0 %52
    %v54 = vrcp.pop 64.0
    %v55 = vmul.f32 64.0, %v54
    %v56 = vsub.f32 1.0, %v55
    %v57 = vmul.f32 %v54, %v56
    %v58 = vadd.f32 %v54, %v57
    %vm59 = vweird.f32 %v54
    %v60 = vsel %vm59, %v54, %v58
    %v61 = vmul.f32 %v50, %v60
    %v62 = vmul.f32 %v53, %v60
    %v63 = vsub.f32 %v45, %v61
    %v64 = vsub.f32 %v46, %v62
    %v65 = vmul.f32 %v63, %v63
    %v66 = vmul.f32 %v64, %v64
    %v67 = vsel %vm47, %v65, 0.0
    %68 = vadd.xlane.f32.xlu0 %v67
    %v69 = vpop.xlane.xlu0 %68
    %v70 = vsel %vm47, %v66, 0.0
    %71 = vadd.xlane.f32.xlu0 %v70
    %v72 = vpop.xlane.xlu0 %71
    %v73 = vmul.f32 %v69, %v60
    %v74 = vmul.f32 %v72, %v60
    %v75 = vadd.f32 %v73, 1e-05
    %v76 = vadd.f32 %v74, 1e-05
    %v77 = vrsqrt.pop %v75
    %v78 = vmul.f32 %v77, %v75
    %v79 = vmul.f32 %v78, %v77
    %v80 = vmul.f32 0.5, %v79
    %v81 = vsub.f32 1.5, %v80
    %v82 = vmul.f32 %v77, %v81
    %vm83 = vweird.f32 %v75
    %vm84 = vweird.f32 %v77
    %vm85 = vmor %vm83, %vm84
    %v86 = vsel %vm85, %v77, %v82
    %v87 = vrsqrt.pop %v76
    %v88 = vmul.f32 %v87, %v76
    %v89 = vmul.f32 %v88, %v87
    %v90 = vmul.f32 0.5, %v89
    %v91 = vsub.f32 1.5, %v90
    %v92 = vmul.f32 %v87, %v91
    %vm93 = vweird.f32 %v76
    %vm94 = vweird.f32 %v87
    %vm95 = vmor %vm93, %vm94
    %v96 = vsel %vm95, %v87, %v92
    %v97 = vmul.f32 %v63, %v86
    %v98 = vmul.f32 %v64, %v96
    %v99 = vld [vmem:[#allocation5] sm:$0x1]
    %v101 = vperm.slane %v99, 0
    %v103 = vmul.f32 %v97, %v101
    %v104 = vmul.f32 %v98, %v101
    %v105 = vld [vmem:[%s2] sm:$0x1]
    %v107 = vperm.slane %v105, 0
    %v109 = vadd.f32 %v103, %v107
    %v110 = vadd.f32 %v104, %v107
    %v111 = vpack.c.bf16 %v109, %v109
    %v112 = vpack.c.bf16 %v110, %v110
    %vm113 = vcmask 519168
    %114 = vst.msk [vmem:[#allocation7] sm:$0xf] %vm113, %v111
    %115 = vst.msk [vmem:[#allocation7 + $0x4] sm:$0xf] %vm113, %v112
    // Predicated region
    $region22: #{tpu_custom_call.1} parent=1 // pred_check
      _
    $region23: #{tpu_custom_call.1} parent=1 // pred_check_branch
      %117 = sbr.rel (0) target = $region25
    $region24: #{tpu_custom_call.1} parent=1 // pred_region
      %119 = vsyncadd [#allocation4], 0
      %s120 = sshll.u32 [#allocation7], 4
      %s121 = int_to_ptr.vmem [resolvable:$true] %s120
      %s122 = sshll.u32 %s3, 4
      %s123 = int_to_ptr.hbm [resolvable:$true] %s122
      %128 = dma.vmem_to_hbm [thread:$0]  %s121, 128, %s123, [#allocation4], 64, 64, 4
    $region25: #{tpu_custom_call.1} parent=1 // pred_fallthru
      _
    // Predicated region
    $region26: #{tpu_custom_call.1} parent=1 // pred_check
      _
    $region27: #{tpu_custom_call.1} parent=1 // pred_check_branch
      %130 = sbr.rel (0) target = $region29
    $region28: #{tpu_custom_call.1} parent=1 // pred_region
      %132 = dma.done [#allocation4], 128
    $region29: #{tpu_custom_call.1} parent=1 // pred_fallthru
      _
    %133 = vsyncpa [#allocation3], 1
    %134 = vsyncpa [#allocation6], 1
    %135 = vsyncpa [#allocation4], 1

</llo_original>
